<compile_context>
chip_gen: v7x
topology: tpu7x:2x2x1
jax: 0.10.0
libtpu: 0.0.40
codegen_flags: <defaults>
</compile_context>

<pallas_src>
import jax
import jax.numpy as jnp
from jax.experimental import pallas as pl
from jax.experimental.pallas import tpu as pltpu

_H_PAD = 128   # padded hidden / output width: one full lane span


def _similarity_kernel(lvec_ref, rvec_ref, feat_ref,
                       w_main_ref, w_feat_ref, bh_ref, wp_ref, bp_ref,
                       out_ref):
    lvec = lvec_ref[...]                        # (TB, 2*mem_dim) f32
    rvec = rvec_ref[...]

    # Elementwise path stays f32 (v5e VPU/EUP have no bf16).
    mult_dist = lvec * rvec
    abs_dist = jnp.abs(lvec - rvec)

    cdt = w_main_ref.dtype                      # bf16 fast path, or f32
    # Single fused K = 4*d2 (=256, 2x128-lane aligned) operand for the MXU.
    x = jnp.concatenate((mult_dist, abs_dist, lvec, rvec), axis=1).astype(cdt)

    pre = jnp.dot(x, w_main_ref[...], preferred_element_type=jnp.float32)
    # Shared feature contribution: (1, feat) @ (feat, H) broadcasts over rows.
    pre = pre + jnp.dot(feat_ref[...].astype(cdt), w_feat_ref[...],
                        preferred_element_type=jnp.float32)
    pre = pre + bh_ref[...]

    h = jax.nn.sigmoid(pre)                     # f32, lane-dense (TB, 128)

    # Tiny second layer kept in f32; padded Wp rows/cols are zero.
    out_ref[...] = (jnp.dot(h, wp_ref[...], preferred_element_type=jnp.float32)
                    + bp_ref[...])


def prepare_params(params, mem_dim, feature_dim, compute_dtype=jnp.bfloat16):
    """One-time weight prep (hoisted out of the per-call path).

    Returns only arrays, so the result can flow through jax.jit as a pytree.
    """
    d2 = 2 * mem_dim
    hidden = params["wh_w"].shape[0]
    assert hidden <= _H_PAD and feature_dim >= 1

    wh_t = params["wh_w"].T.astype(jnp.float32)           # (4*d2 + feat, hidden)
    w_main = wh_t[:4 * d2]                                 # cols for [mult|abs|l|r]
    w_feat = wh_t[4 * d2: 4 * d2 + feature_dim]            # cols for feature_vec

    pad_h = _H_PAD - hidden
    w_main = jnp.pad(w_main, ((0, 0), (0, pad_h))).astype(compute_dtype)
    w_feat = jnp.pad(w_feat, ((0, 0), (0, pad_h))).astype(compute_dtype)
    bh = jnp.pad(params["wh_b"], (0, pad_h)).reshape(1, _H_PAD).astype(jnp.float32)

    # Wp: (2, hidden) -> (hidden, 2); pad rows (zero => padded h cols inert)
    # and pad cols to 128 for a lane-dense output store.
    wp = jnp.pad(params["wp_w"].T.astype(jnp.float32),
                 ((0, pad_h), (0, _H_PAD - 2)))
    bp = jnp.pad(params["wp_b"].astype(jnp.float32),
                 (0, _H_PAD - 2)).reshape(1, _H_PAD)

    return {"w_main": w_main, "w_feat": w_feat, "bh": bh, "wp": wp, "bp": bp}


def similarity_forward(lvec, rvec, feature_vec, prepared, *, block_b=128):
    """Similarity forward for a batch of (lvec, rvec) pairs sharing feature_vec.

    lvec, rvec   : (B, 2*mem_dim) float32   (B tree nodes batched per call)
    feature_vec  : (1, feature_dim) float32 (broadcast across the batch)
    prepared     : output of prepare_params()
    returns      : (B, 2) float32
    """
    B, d2 = lvec.shape
    feat_dim = feature_vec.shape[1]

    # Pad batch to a multiple of 8 sublanes and of the batch tile.
    B_pad = ((B + 7) // 8) * 8
    TB = min(block_b, B_pad)
    B_pad = ((B_pad + TB - 1) // TB) * TB
    if B_pad != B:
        pad = ((0, B_pad - B), (0, 0))
        lvec_p = jnp.pad(lvec, pad)
        rvec_p = jnp.pad(rvec, pad)
    else:
        lvec_p, rvec_p = lvec, rvec

    k_main = 4 * d2
    flops = (2 * B_pad * k_main * _H_PAD          # fused first-layer dot
             + 2 * feat_dim * _H_PAD              # feature dot
             + 2 * B_pad * _H_PAD * _H_PAD)       # second layer
    bytes_accessed = (
        (lvec_p.size + rvec_p.size + feature_vec.size) * 4
        + prepared["w_main"].size * prepared["w_main"].dtype.itemsize
        + prepared["w_feat"].size * prepared["w_feat"].dtype.itemsize
        + (prepared["bh"].size + prepared["wp"].size + prepared["bp"].size) * 4
        + B_pad * _H_PAD * 4)
    cost = pl.CostEstimate(flops=flops,
                           transcendentals=B_pad * _H_PAD,
                           bytes_accessed=bytes_accessed)

    out_pad = pl.pallas_call(
        _similarity_kernel,
        out_shape=jax.ShapeDtypeStruct((B_pad, _H_PAD), jnp.float32),
        grid=(B_pad // TB,),
        in_specs=[
            pl.BlockSpec((TB, d2), lambda i: (i, 0)),              # lvec
            pl.BlockSpec((TB, d2), lambda i: (i, 0)),              # rvec
            pl.BlockSpec((1, feat_dim), lambda i: (0, 0)),         # feature_vec
            pl.BlockSpec((k_main, _H_PAD), lambda i: (0, 0)),      # w_main
            pl.BlockSpec((feat_dim, _H_PAD), lambda i: (0, 0)),    # w_feat
            pl.BlockSpec((1, _H_PAD), lambda i: (0, 0)),           # bh
            pl.BlockSpec((_H_PAD, _H_PAD), lambda i: (0, 0)),      # wp
            pl.BlockSpec((1, _H_PAD), lambda i: (0, 0)),           # bp
        ],
        out_specs=pl.BlockSpec((TB, _H_PAD), lambda i: (i, 0)),
        compiler_params=pltpu.CompilerParams(
            dimension_semantics=("parallel",)),                    # v7x: 2 TCs
        cost_estimate=cost,
    )(lvec_p, rvec_p, feature_vec,
      prepared["w_main"], prepared["w_feat"], prepared["bh"],
      prepared["wp"], prepared["bp"])

    return out_pad[:B, :2]


def similarity_reference(lvec, rvec, feature_vec, params):
    """Pure-JAX reference mirroring the PyTorch module (feature broadcast)."""
    B = lvec.shape[0]
    feat = jnp.broadcast_to(feature_vec, (B, feature_vec.shape[1]))
    mult_dist = lvec * rvec
    abs_dist = jnp.abs(lvec - rvec)
    concat_vec = jnp.concatenate((mult_dist, abs_dist, lvec, rvec, feat), axis=1)
    h = jax.nn.sigmoid(
        jnp.dot(concat_vec, params["wh_w"].T, precision=jax.lax.Precision.HIGHEST)
        + params["wh_b"])
    return (jnp.dot(h, params["wp_w"].T, precision=jax.lax.Precision.HIGHEST)
            + params["wp_b"])


def init_params(key, mem_dim, hidden_dim, feature_dim):
    """Deterministic PyTorch-nn.Linear-style init (uniform +-1/sqrt(fan_in))."""
    in_wh = 8 * mem_dim + feature_dim
    k1, k2, k3, k4 = jax.random.split(key, 4)
    bnd_h = 1.0 / jnp.sqrt(in_wh)
    bnd_p = 1.0 / jnp.sqrt(hidden_dim)
    return {
        "wh_w": jax.random.uniform(k1, (hidden_dim, in_wh), jnp.float32, -bnd_h, bnd_h),
        "wh_b": jax.random.uniform(k2, (hidden_dim,), jnp.float32, -bnd_h, bnd_h),
        "wp_w": jax.random.uniform(k3, (2, hidden_dim), jnp.float32, -bnd_p, bnd_p),
        "wp_b": jax.random.uniform(k4, (2,), jnp.float32, -bnd_p, bnd_p),
    }


if __name__ == "__main__":
    mem_dim = 32
    hidden_dim = 32
    feature_dim = 16
    batch = 1            # original domain_feature=True path uses a single pair

    key = jax.random.PRNGKey(0)
    kl, kr, kf, kp = jax.random.split(key, 4)
    lvec = jax.random.normal(kl, (batch, 2 * mem_dim), jnp.float32)
    rvec = jax.random.normal(kr, (batch, 2 * mem_dim), jnp.float32)
    feature_vec = jax.random.normal(kf, (1, feature_dim), jnp.float32)

    params = init_params(kp, mem_dim, hidden_dim, feature_dim)
    fwd = jax.jit(similarity_forward)

    # --- f32 weights: tight check against the pure-JAX reference ---
    prep_f32 = prepare_params(params, mem_dim, feature_dim,
                              compute_dtype=jnp.float32)
    out_f32 = jax.block_until_ready(fwd(lvec, rvec, feature_vec, prep_f32))
    ref = similarity_reference(lvec, rvec, feature_vec, params)
    assert out_f32.shape == (batch, 2)
    assert jnp.allclose(out_f32, ref, atol=1e-4, rtol=1e-4), (out_f32, ref)

    # --- bf16 first-layer weights (MXU-native fast path): looser tolerance ---
    prep_bf16 = prepare_params(params, mem_dim, feature_dim,
                               compute_dtype=jnp.bfloat16)
    out_bf16 = jax.block_until_ready(fwd(lvec, rvec, feature_vec, prep_bf16))
    assert jnp.allclose(out_bf16, ref, atol=5e-2, rtol=5e-2), (out_bf16, ref)

    # --- batched call: many tree nodes at once (main perf lever) ---
    nodes = 64
    lvec_b = jax.random.normal(jax.random.PRNGKey(1), (nodes, 2 * mem_dim), jnp.float32)
    rvec_b = jax.random.normal(jax.random.PRNGKey(2), (nodes, 2 * mem_dim), jnp.float32)
    out_b = jax.block_until_ready(fwd(lvec_b, rvec_b, feature_vec, prep_f32))
    ref_b = similarity_reference(lvec_b, rvec_b, feature_vec, params)
    assert out_b.shape == (nodes, 2)
    assert jnp.allclose(out_b, ref_b, atol=1e-4, rtol=1e-4), (out_b, ref_b)

    print("KERNEL_OK")
</pallas_src>

<mosaic_0001>
module attributes {stable_mosaic.version = 11 : i64} {
  func.func @_similarity_kernel(%arg0: i32, %arg1: memref<8x64xf32, #tpu.memory_space<vmem>>, %arg2: memref<8x64xf32, #tpu.memory_space<vmem>>, %arg3: memref<1x16xf32, #tpu.memory_space<vmem>>, %arg4: memref<256x128xf32, #tpu.memory_space<vmem>>, %arg5: memref<16x128xf32, #tpu.memory_space<vmem>>, %arg6: memref<1x128xf32, #tpu.memory_space<vmem>>, %arg7: memref<128x128xf32, #tpu.memory_space<vmem>>, %arg8: memref<1x128xf32, #tpu.memory_space<vmem>>, %arg9: memref<8x128xf32, #tpu.memory_space<vmem>>) attributes {dimension_semantics = [#tpu.dimension_semantics<parallel>], iteration_bounds = array<i64: 1>, scalar_prefetch = 0 : i64, scratch_operands = 0 : i64, tpu.core_type = #tpu.core_type<tc>, window_params = [{transform_indices = @transform_0, window_bounds = array<i64: 8, 64>}, {transform_indices = @transform_1, window_bounds = array<i64: 8, 64>}, {pipeline_mode = #tpu.pipeline_mode<synchronous>, transform_indices = @transform_2, window_bounds = array<i64: 1, 16>}, {pipeline_mode = #tpu.pipeline_mode<synchronous>, transform_indices = @transform_3, window_bounds = array<i64: 256, 128>}, {pipeline_mode = #tpu.pipeline_mode<synchronous>, transform_indices = @transform_4, window_bounds = array<i64: 16, 128>}, {pipeline_mode = #tpu.pipeline_mode<synchronous>, transform_indices = @transform_5, window_bounds = array<i64: 1, 128>}, {pipeline_mode = #tpu.pipeline_mode<synchronous>, transform_indices = @transform_6, window_bounds = array<i64: 128, 128>}, {pipeline_mode = #tpu.pipeline_mode<synchronous>, transform_indices = @transform_7, window_bounds = array<i64: 1, 128>}, {transform_indices = @transform_8, window_bounds = array<i64: 8, 128>}]} {
    %c0 = arith.constant 0 : index
    %c0_0 = arith.constant 0 : index
    %0 = vector.load %arg1[%c0, %c0_0] : memref<8x64xf32, #tpu.memory_space<vmem>>, vector<8x64xf32>
    %c0_1 = arith.constant 0 : index
    %c0_2 = arith.constant 0 : index
    %1 = vector.load %arg2[%c0_1, %c0_2] : memref<8x64xf32, #tpu.memory_space<vmem>>, vector<8x64xf32>
    %2 = arith.mulf %0, %1 : vector<8x64xf32>
    %3 = arith.subf %0, %1 : vector<8x64xf32>
    %4 = math.absf %3 : vector<8x64xf32>
    %5 = tpu.concatenate %2, %4, %0, %1 in 1 : vector<8x64xf32>, vector<8x64xf32>, vector<8x64xf32>, vector<8x64xf32> -> vector<8x256xf32>
    %c0_3 = arith.constant 0 : index
    %c0_4 = arith.constant 0 : index
    %6 = vector.load %arg4[%c0_3, %c0_4] : memref<256x128xf32, #tpu.memory_space<vmem>>, vector<256x128xf32>
    %cst = arith.constant dense<0.000000e+00> : vector<8x128xf32>
    %7 = tpu.matmul %5, %6, %cst {dimension_numbers = #tpu.dot_dimension_numbers<[1], [0], [0], [1], [0, 0, 1, 1], [], []>} : vector<8x256xf32>, vector<256x128xf32>, vector<8x128xf32> -> vector<8x128xf32>
    %c0_5 = arith.constant 0 : index
    %c0_6 = arith.constant 0 : index
    %8 = vector.load %arg3[%c0_5, %c0_6] : memref<1x16xf32, #tpu.memory_space<vmem>>, vector<1x16xf32>
    %c0_7 = arith.constant 0 : index
    %c0_8 = arith.constant 0 : index
    %9 = vector.load %arg5[%c0_7, %c0_8] : memref<16x128xf32, #tpu.memory_space<vmem>>, vector<16x128xf32>
    %cst_9 = arith.constant dense<0.000000e+00> : vector<1x128xf32>
    %10 = tpu.matmul %8, %9, %cst_9 {dimension_numbers = #tpu.dot_dimension_numbers<[1], [0], [0], [1], [0, 0, 1, 1], [], []>} : vector<1x16xf32>, vector<16x128xf32>, vector<1x128xf32> -> vector<1x128xf32>
    %11 = vector.broadcast %10 : vector<1x128xf32> to vector<8x128xf32>
    %12 = arith.addf %7, %11 : vector<8x128xf32>
    %c0_10 = arith.constant 0 : index
    %c0_11 = arith.constant 0 : index
    %13 = vector.load %arg6[%c0_10, %c0_11] : memref<1x128xf32, #tpu.memory_space<vmem>>, vector<1x128xf32>
    %14 = vector.broadcast %13 : vector<1x128xf32> to vector<8x128xf32>
    %15 = arith.addf %12, %14 : vector<8x128xf32>
    %16 = arith.negf %15 : vector<8x128xf32>
    %17 = math.exp %16 : vector<8x128xf32>
    %cst_12 = arith.constant 1.000000e+00 : f32
    %18 = vector.broadcast %cst_12 : f32 to vector<8x128xf32>
    %19 = arith.addf %18, %17 : vector<8x128xf32>
    %20 = arith.divf %18, %19 : vector<8x128xf32>
    %c0_13 = arith.constant 0 : index
    %c0_14 = arith.constant 0 : index
    %21 = vector.load %arg7[%c0_13, %c0_14] : memref<128x128xf32, #tpu.memory_space<vmem>>, vector<128x128xf32>
    %cst_15 = arith.constant dense<0.000000e+00> : vector<8x128xf32>
    %22 = tpu.matmul %20, %21, %cst_15 {dimension_numbers = #tpu.dot_dimension_numbers<[1], [0], [0], [1], [0, 0, 1, 1], [], []>} : vector<8x128xf32>, vector<128x128xf32>, vector<8x128xf32> -> vector<8x128xf32>
    %c0_16 = arith.constant 0 : index
    %c0_17 = arith.constant 0 : index
    %23 = vector.load %arg8[%c0_16, %c0_17] : memref<1x128xf32, #tpu.memory_space<vmem>>, vector<1x128xf32>
    %24 = vector.broadcast %23 : vector<1x128xf32> to vector<8x128xf32>
    %25 = arith.addf %22, %24 : vector<8x128xf32>
    %c0_18 = arith.constant 0 : index
    %c0_19 = arith.constant 0 : index
    %26 = vector.load %arg9[%c0_18, %c0_19] : memref<8x128xf32, #tpu.memory_space<vmem>>, vector<8x128xf32>
    tpu.vector_store %arg9[%c0_18, %c0_19], %25 {strides = array<i32>} : memref<8x128xf32, #tpu.memory_space<vmem>>, vector<8x128xf32>,
    return
  }
  func.func @transform_0(%arg0: i32) -> (i32, i32) {
    %c0_i32 = arith.constant 0 : i32
    %c0_i32_0 = arith.constant 0 : i32
    return %arg0, %c0_i32 : i32, i32
  }
  func.func @transform_1(%arg0: i32) -> (i32, i32) {
    %c0_i32 = arith.constant 0 : i32
    %c0_i32_0 = arith.constant 0 : i32
    return %arg0, %c0_i32 : i32, i32
  }
  func.func @transform_2(%arg0: i32) -> (i32, i32) {
    %c0_i32 = arith.constant 0 : i32
    %c0_i32_0 = arith.constant 0 : i32
    %c0_i32_1 = arith.constant 0 : i32
    return %c0_i32, %c0_i32_0 : i32, i32
  }
  func.func @transform_3(%arg0: i32) -> (i32, i32) {
    %c0_i32 = arith.constant 0 : i32
    %c0_i32_0 = arith.constant 0 : i32
    %c0_i32_1 = arith.constant 0 : i32
    return %c0_i32, %c0_i32_0 : i32, i32
  }
  func.func @transform_4(%arg0: i32) -> (i32, i32) {
    %c0_i32 = arith.constant 0 : i32
    %c0_i32_0 = arith.constant 0 : i32
    %c0_i32_1 = arith.constant 0 : i32
    return %c0_i32, %c0_i32_0 : i32, i32
  }
  func.func @transform_5(%arg0: i32) -> (i32, i32) {
    %c0_i32 = arith.constant 0 : i32
    %c0_i32_0 = arith.constant 0 : i32
    %c0_i32_1 = arith.constant 0 : i32
    return %c0_i32, %c0_i32_0 : i32, i32
  }
  func.func @transform_6(%arg0: i32) -> (i32, i32) {
    %c0_i32 = arith.constant 0 : i32
    %c0_i32_0 = arith.constant 0 : i32
    %c0_i32_1 = arith.constant 0 : i32
    return %c0_i32, %c0_i32_0 : i32, i32
  }
  func.func @transform_7(%arg0: i32) -> (i32, i32) {
    %c0_i32 = arith.constant 0 : i32
    %c0_i32_0 = arith.constant 0 : i32
    %c0_i32_1 = arith.constant 0 : i32
    return %c0_i32, %c0_i32_0 : i32, i32
  }
  func.func @transform_8(%arg0: i32) -> (i32, i32) {
    %c0_i32 = arith.constant 0 : i32
    %c0_i32_0 = arith.constant 0 : i32
    return %arg0, %c0_i32 : i32, i32
  }
}

</mosaic_0001>

<llo_original>
// kernel: similarity_forward.1
$region0: #{similarity_forward.1}
  #allocation0 [shape = 'u32[]', space=smem, size = 0x4, offset = 0x4, fixed_abs, tag = 'smem constant byte address 0x4 - core index']
  #allocation1 [shape = 'u32[144,128]{1,0:T(1,128)}', space=vmem, size = 0x12000, scoped, tag = 'internal scratch']
  %s0 = inlined_call_operand.vmem [shape: f32[8,64], index: 0, kind: input, shape index: {}]
  %s1 = inlined_call_operand.vmem [shape: f32[8,64], index: 1, kind: input, shape index: {}]
  %s2 = inlined_call_operand.vmem [shape: f32[1,16], index: 2, kind: input, shape index: {}]
  %s3 = inlined_call_operand.hbm [shape: f32[256,128], index: 3, kind: input, shape index: {}]
  %s4 = inlined_call_operand.vmem [shape: f32[16,128], index: 4, kind: input, shape index: {}]
  %s5 = inlined_call_operand.vmem [shape: f32[1,128], index: 5, kind: input, shape index: {}]
  %s6 = inlined_call_operand.hbm [shape: f32[128,128], index: 6, kind: input, shape index: {}]
  %s7 = inlined_call_operand.vmem [shape: f32[1,128], index: 7, kind: input, shape index: {}]
  %s8 = inlined_call_operand.vmem [shape: f32[8,128], index: 8, kind: output, shape index: {}]
  %s9 = sld [smem:[#allocation0]]
  $region50: #{similarity_forward.1} parent=0
    _
  %s11 = ssub.s32 1, %s9
  %s12 = scalar_select 0, %s11, %s9
  $region1: #{similarity_forward.1} parent=0
    #allocation2 [shape = 'u8[131072]{0}', space=vmem, size = 0x20000, scoped, tag = 'input window, operand 3, single buffered']
    #allocation3 [shape = 's32[1]{0}', space=sflag, size = 0x4, scoped, tag = 'scoped memory for similarity_forward.1']
    #allocation4 [shape = 'u8[65536]{0}', space=vmem, size = 0x10000, scoped, tag = 'input window, operand 6, single buffered']
    #allocation5 [shape = 's32[1]{0}', space=sflag, size = 0x4, scoped, tag = 'scoped memory for similarity_forward.1']
    %13 = vsyncpa [#allocation3], 0
    %14 = vsyncpa [#allocation5], 0
    // Predicated region
    $region2: #{similarity_forward.1} parent=1 // pred_check
      _
    $region3: #{similarity_forward.1} parent=1 // pred_check_branch
      %16 = sbr.rel (0) target = $region5
    $region4: #{similarity_forward.1} parent=1 // pred_region
      _
    $region5: #{similarity_forward.1} parent=1 // pred_fallthru
      _
    // Predicated region
    $region6: #{similarity_forward.1} parent=1 // pred_check
      _
    $region7: #{similarity_forward.1} parent=1 // pred_check_branch
      %18 = sbr.rel (0) target = $region9
    $region8: #{similarity_forward.1} parent=1 // pred_region
      _
    $region9: #{similarity_forward.1} parent=1 // pred_fallthru
      _
    // Predicated region
    $region10: #{similarity_forward.1} parent=1 // pred_check
      _
    $region11: #{similarity_forward.1} parent=1 // pred_check_branch
      %20 = sbr.rel (0) target = $region13
    $region12: #{similarity_forward.1} parent=1 // pred_region
      _
    $region13: #{similarity_forward.1} parent=1 // pred_fallthru
      _
    // Predicated region
    $region14: #{similarity_forward.1} parent=1 // pred_check
      _
    $region15: #{similarity_forward.1} parent=1 // pred_check_branch
      %22 = sbr.rel (0) target = $region17
    $region16: #{similarity_forward.1} parent=1 // pred_region
      %s24 = ssub.s32 4096, 4096
      %25 = vsyncadd [#allocation3], %s24
      %s26 = sshll.u32 [#allocation2], 4
      %s27 = int_to_ptr.vmem [resolvable:$true] %s26
      %32 = dma.hbm_to_vmem [thread:$0]  %s3, 4096, %s27, [#allocation3], 128, 128, 8
    $region17: #{similarity_forward.1} parent=1 // pred_fallthru
      _
    // Predicated region
    $region18: #{similarity_forward.1} parent=1 // pred_check
      _
    $region19: #{similarity_forward.1} parent=1 // pred_check_branch
      %34 = sbr.rel (0) target = $region21
    $region20: #{similarity_forward.1} parent=1 // pred_region
      _
    $region21: #{similarity_forward.1} parent=1 // pred_fallthru
      _
    // Predicated region
    $region22: #{similarity_forward.1} parent=1 // pred_check
      _
    $region23: #{similarity_forward.1} parent=1 // pred_check_branch
      %36 = sbr.rel (0) target = $region25
    $region24: #{similarity_forward.1} parent=1 // pred_region
      _
    $region25: #{similarity_forward.1} parent=1 // pred_fallthru
      _
    // Predicated region
    $region26: #{similarity_forward.1} parent=1 // pred_check
      _
    $region27: #{similarity_forward.1} parent=1 // pred_check_branch
      %38 = sbr.rel (0) target = $region29
    $region28: #{similarity_forward.1} parent=1 // pred_region
      %s40 = ssub.s32 2048, 2048
      %41 = vsyncadd [#allocation5], %s40
      %s42 = sshll.u32 [#allocation4], 4
      %s43 = int_to_ptr.vmem [resolvable:$true] %s42
      %48 = dma.hbm_to_vmem [thread:$0]  %s6, 2048, %s43, [#allocation5], 128, 128, 8
    $region29: #{similarity_forward.1} parent=1 // pred_fallthru
      _
    // Predicated region
    $region30: #{similarity_forward.1} parent=1 // pred_check
      _
    $region31: #{similarity_forward.1} parent=1 // pred_check_branch
      %50 = sbr.rel (0) target = $region33
    $region32: #{similarity_forward.1} parent=1 // pred_region
      _
    $region33: #{similarity_forward.1} parent=1 // pred_fallthru
      _
    // Predicated region
    $region34: #{similarity_forward.1} parent=1 // pred_check
      _
    $region35: #{similarity_forward.1} parent=1 // pred_check_branch
      %52 = sbr.rel (0) target = $region37
    $region36: #{similarity_forward.1} parent=1 // pred_region
      %53 = dma.done [#allocation3], 4096
    $region37: #{similarity_forward.1} parent=1 // pred_fallthru
      _
    // Predicated region
    $region38: #{similarity_forward.1} parent=1 // pred_check
      _
    $region39: #{similarity_forward.1} parent=1 // pred_check_branch
      %55 = sbr.rel (0) target = $region41
    $region40: #{similarity_forward.1} parent=1 // pred_region
      %56 = dma.done [#allocation5], 2048
    $region41: #{similarity_forward.1} parent=1 // pred_fallthru
      _
    %v57 = vld [vmem:[%s0] sm:$0xff]
    %v58 = vld [vmem:[%s1] sm:$0xff]
    %v59 = vmul.f32 %v57, %v58
    %v60 = vsub.f32 %v57, %v58
    %v61 = vand.u32 2147483647, %v60
    %63 = vrot.lane.b32.xlu0 %v61, 64
    %v64 = vpop.permute.xlu0 %63
    %67 = vrot.lane.b32.xlu0 %v58, 64
    %v68 = vpop.permute.xlu0 %67
    %vm70 = vcmask 523264
    %v71 = vsel %vm70, %v59, %v64
    %v72 = vsel %vm70, %v57, %v68
    %v73 = vld [vmem:[#allocation2] sm:$0xff]
    %v74 = vld [vmem:[#allocation2 + $0x8] sm:$0xff]
    %v75 = vld [vmem:[#allocation2 + $0x10] sm:$0xff]
    %v76 = vld [vmem:[#allocation2 + $0x18] sm:$0xff]
    %v77 = vld [vmem:[#allocation2 + $0x20] sm:$0xff]
    %v78 = vld [vmem:[#allocation2 + $0x28] sm:$0xff]
    %v79 = vld [vmem:[#allocation2 + $0x30] sm:$0xff]
    %v80 = vld [vmem:[#allocation2 + $0x38] sm:$0xff]
    %v81 = vld [vmem:[#allocation2 + $0x40] sm:$0xff]
    %v82 = vld [vmem:[#allocation2 + $0x48] sm:$0xff]
    %v83 = vld [vmem:[#allocation2 + $0x50] sm:$0xff]
    %v84 = vld [vmem:[#allocation2 + $0x58] sm:$0xff]
    %v85 = vld [vmem:[#allocation2 + $0x60] sm:$0xff]
    %v86 = vld [vmem:[#allocation2 + $0x68] sm:$0xff]
    %v87 = vld [vmem:[#allocation2 + $0x70] sm:$0xff]
    %v88 = vld [vmem:[#allocation2 + $0x78] sm:$0xff]
    %v89 = vld [vmem:[#allocation2 + $0x80] sm:$0xff]
    %v90 = vld [vmem:[#allocation2 + $0x88] sm:$0xff]
    %v91 = vld [vmem:[#allocation2 + $0x90] sm:$0xff]
    %v92 = vld [vmem:[#allocation2 + $0x98] sm:$0xff]
    %v93 = vld [vmem:[#allocation2 + $0xa0] sm:$0xff]
    %v94 = vld [vmem:[#allocation2 + $0xa8] sm:$0xff]
    %v95 = vld [vmem:[#allocation2 + $0xb0] sm:$0xff]
    %v96 = vld [vmem:[#allocation2 + $0xb8] sm:$0xff]
    %v97 = vld [vmem:[#allocation2 + $0xc0] sm:$0xff]
    %v98 = vld [vmem:[#allocation2 + $0xc8] sm:$0xff]
    %v99 = vld [vmem:[#allocation2 + $0xd0] sm:$0xff]
    %v100 = vld [vmem:[#allocation2 + $0xd8] sm:$0xff]
    %v101 = vld [vmem:[#allocation2 + $0xe0] sm:$0xff]
    %v102 = vld [vmem:[#allocation2 + $0xe8] sm:$0xff]
    %v103 = vld [vmem:[#allocation2 + $0xf0] sm:$0xff]
    %v104 = vld [vmem:[#allocation2 + $0xf8] sm:$0xff]
    %v105 = vld [vmem:[%s2] sm:$0x1]
    %v106 = vld [vmem:[%s4] sm:$0xff]
    %v107 = vld [vmem:[%s4 + $0x8] sm:$0xff]
    %vm108 = vcmask 130048
    %v110 = vsel %vm108, %v105, 0
    %112 = vmatprep.subr.mxu0 0.0
    %113 = vmatpush1.msra.mxu0 %v106
    %114 = vmatprep.subr.mxu0 0.0
    %115 = vmatpush1.msra.mxu0 %v107
    %116 = vmatprep.subr.mxu0 0.0
    %117 = vmatpush1.msra.mxu0 0.0
    %118 = vmatprep.subr.mxu0 0.0
    %119 = vmatpush1.msra.mxu0 0.0
    %120 = vmatprep.subr.mxu0 0.0
    %121 = vmatpush1.msra.mxu0 0.0
    %122 = vmatprep.subr.mxu0 0.0
    %123 = vmatpush1.msra.mxu0 0.0
    %124 = vmatprep.subr.mxu0 0.0
    %125 = vmatpush1.msra.mxu0 0.0
    %126 = vmatprep.subr.mxu0 0.0
    %127 = vmatpush1.msra.mxu0 0.0
    %128 = vmatprep.subr.mxu0 0.0
    %129 = vmatpush1.msra.mxu0 0.0
    %130 = vmatprep.subr.mxu0 0.0
    %131 = vmatpush1.msra.mxu0 0.0
    %132 = vmatprep.subr.mxu0 0.0
    %133 = vmatpush1.msra.mxu0 0.0
    %134 = vmatprep.subr.mxu0 0.0
    %135 = vmatpush1.msra.mxu0 0.0
    %136 = vmatprep.subr.mxu0 0.0
    %137 = vmatpush1.msra.mxu0 0.0
    %138 = vmatprep.subr.mxu0 0.0
    %139 = vmatpush1.msra.mxu0 0.0
    %140 = vmatprep.subr.mxu0 0.0
    %141 = vmatpush1.msra.mxu0 0.0
    %142 = vmatprep.subr.mxu0 0.0
    %143 = vmatpush1.msra.mxu0 0.0
    %144 = vmatprep.subr.mxu0 0.0
    %145 = vmatpush1.msra.mxu0 0.0
    %146 = vmatprep.subr.mxu0 0.0
    %147 = vmatpush1.msra.mxu0 0.0
    %148 = vmatprep.subr.mxu0 0.0
    %149 = vmatpush1.msra.mxu0 0.0
    %150 = vmatprep.subr.mxu0 0.0
    %151 = vmatpush1.msra.mxu0 0.0
    %152 = vmatprep.subr.mxu0 0.0
    %153 = vmatpush1.msra.mxu0 0.0
    %154 = vmatprep.subr.mxu0 0.0
    %155 = vmatpush1.msra.mxu0 0.0
    %156 = vmatprep.subr.mxu0 0.0
    %157 = vmatpush1.msra.mxu0 0.0
    %158 = vmatprep.subr.mxu0 0.0
    %159 = vmatpush1.msra.mxu0 0.0
    %160 = vmatprep.subr.mxu0 0.0
    %161 = vmatpush1.msra.mxu0 0.0
    %162 = vmatprep.subr.mxu0 0.0
    %163 = vmatpush1.msra.mxu0 0.0
    %164 = vmatprep.subr.mxu0 0.0
    %165 = vmatpush1.msra.mxu0 0.0
    %166 = vmatprep.subr.mxu0 0.0
    %167 = vmatpush1.msra.mxu0 0.0
    %168 = vmatprep.subr.mxu0 0.0
    %169 = vmatpush1.msra.mxu0 0.0
    %170 = vmatprep.subr.mxu0 0.0
    %171 = vmatpush1.msra.mxu0 0.0
    %172 = vmatprep.subr.mxu0 0.0
    %173 = vmatpush1.msra.mxu0 0.0
    %174 = vmatprep.subr.mxu0 0.0
    %175 = vmatpush1.msra.mxu0 0.0
    %176 = vmatprep.mubr.f32.mxu0 0.0
    %177 = vmatmul.mubr.f32.gmra.mrb[0].mxu0 %v110
    %v178 = vpop.f32.mrb[0].mxu0
    %v179 = vadd.f32 0.0, %v178
    %v180 = vpop.f32.mrb[0].mxu0
    %181 = vdwg.mxu0
    %v182 = vlaneseq
    %v183 = vshrl.u32 %v182, 7
    %v184 = vsub.s32 0, %v183
    %v185 = vrot.slane %v179, %v184
    %186 = vmatprep.subr.mxu0 0.0
    %187 = vmatpush1.msra.mxu0 %v73
    %188 = vmatprep.subr.mxu0 0.0
    %189 = vmatpush1.msra.mxu0 %v74
    %190 = vmatprep.subr.mxu0 0.0
    %191 = vmatpush1.msra.mxu0 %v75
    %192 = vmatprep.subr.mxu0 0.0
    %193 = vmatpush1.msra.mxu0 %v76
    %194 = vmatprep.subr.mxu0 0.0
    %195 = vmatpush1.msra.mxu0 %v77
    %196 = vmatprep.subr.mxu0 0.0
    %197 = vmatpush1.msra.mxu0 %v78
    %198 = vmatprep.subr.mxu0 0.0
    %199 = vmatpush1.msra.mxu0 %v79
    %200 = vmatprep.subr.mxu0 0.0
    %201 = vmatpush1.msra.mxu0 %v80
    %202 = vmatprep.subr.mxu0 0.0
    %203 = vmatpush1.msra.mxu0 %v81
    %204 = vmatprep.subr.mxu0 0.0
    %205 = vmatpush1.msra.mxu0 %v82
    %206 = vmatprep.subr.mxu0 0.0
    %207 = vmatpush1.msra.mxu0 %v83
    %208 = vmatprep.subr.mxu0 0.0
    %209 = vmatpush1.msra.mxu0 %v84
    %210 = vmatprep.subr.mxu0 0.0
    %211 = vmatpush1.msra.mxu0 %v85
    %212 = vmatprep.subr.mxu0 0.0
    %213 = vmatpush1.msra.mxu0 %v86
    %214 = vmatprep.subr.mxu0 0.0
    %215 = vmatpush1.msra.mxu0 %v87
    %216 = vmatprep.subr.mxu0 0.0
    %217 = vmatpush1.msra.mxu0 %v88
    %218 = vmatprep.subr.mxu0 0.0
    %219 = vmatpush1.msra.mxu0 %v89
    %220 = vmatprep.subr.mxu0 0.0
    %221 = vmatpush1.msra.mxu0 %v90
    %222 = vmatprep.subr.mxu0 0.0
    %223 = vmatpush1.msra.mxu0 %v91
    %224 = vmatprep.subr.mxu0 0.0
    %225 = vmatpush1.msra.mxu0 %v92
    %226 = vmatprep.subr.mxu0 0.0
    %227 = vmatpush1.msra.mxu0 %v93
    %228 = vmatprep.subr.mxu0 0.0
    %229 = vmatpush1.msra.mxu0 %v94
    %230 = vmatprep.subr.mxu0 0.0
    %231 = vmatpush1.msra.mxu0 %v95
    %232 = vmatprep.subr.mxu0 0.0
    %233 = vmatpush1.msra.mxu0 %v96
    %234 = vmatprep.subr.mxu0 0.0
    %235 = vmatpush1.msra.mxu0 %v97
    %236 = vmatprep.subr.mxu0 0.0
    %237 = vmatpush1.msra.mxu0 %v98
    %238 = vmatprep.subr.mxu0 0.0
    %239 = vmatpush1.msra.mxu0 %v99
    %240 = vmatprep.subr.mxu0 0.0
    %241 = vmatpush1.msra.mxu0 %v100
    %242 = vmatprep.subr.mxu0 0.0
    %243 = vmatpush1.msra.mxu0 %v101
    %244 = vmatprep.subr.mxu0 0.0
    %245 = vmatpush1.msra.mxu0 %v102
    %246 = vmatprep.subr.mxu0 0.0
    %247 = vmatpush1.msra.mxu0 %v103
    %248 = vmatprep.subr.mxu0 0.0
    %249 = vmatpush1.msra.mxu0 %v104
    %250 = vmatprep.mubr.f32.mxu0 %v72
    %251 = vmatmul.mubr.f32.gmra.mrb[0].mxu0 %v71
    %v252 = vpop.f32.mrb[0].mxu0
    %v253 = vadd.f32 %v185, %v252
    %v254 = vpop.f32.mrb[0].mxu0
    %255 = vdwg.mxu0
    %v256 = vld [vmem:[%s5] sm:$0x1]
    %v258 = vlaneseq
    %v259 = vshrl.u32 %v258, 7
    %v260 = vsub.s32 0, %v259
    %v261 = vrot.slane %v256, %v260
    %v263 = vadd.f32 %v253, %v261
    %v264 = vxor.u32 %v263, 2147483648
    %v265 = vmul.f32 %v264, 1.442695
    %v266 = vpow.pop %v265
    %v267 = vadd.f32 %v266, 1.0
    %v268 = vrcp.pop %v267
    %v269 = vmul.f32 1.0, %v268
    %v270 = vld [vmem:[#allocation4] sm:$0xff]
    %v271 = vld [vmem:[#allocation4 + $0x8] sm:$0xff]
    %v272 = vld [vmem:[#allocation4 + $0x10] sm:$0xff]
    %v273 = vld [vmem:[#allocation4 + $0x18] sm:$0xff]
    %v274 = vld [vmem:[#allocation4 + $0x20] sm:$0xff]
    %v275 = vld [vmem:[#allocation4 + $0x28] sm:$0xff]
    %v276 = vld [vmem:[#allocation4 + $0x30] sm:$0xff]
    %v277 = vld [vmem:[#allocation4 + $0x38] sm:$0xff]
    %v278 = vld [vmem:[#allocation4 + $0x40] sm:$0xff]
    %v279 = vld [vmem:[#allocation4 + $0x48] sm:$0xff]
    %v280 = vld [vmem:[#allocation4 + $0x50] sm:$0xff]
    %v281 = vld [vmem:[#allocation4 + $0x58] sm:$0xff]
    %v282 = vld [vmem:[#allocation4 + $0x60] sm:$0xff]
    %v283 = vld [vmem:[#allocation4 + $0x68] sm:$0xff]
    %v284 = vld [vmem:[#allocation4 + $0x70] sm:$0xff]
    %v285 = vld [vmem:[#allocation4 + $0x78] sm:$0xff]
    %v286 = vld [vmem:[%s7] sm:$0x1]
    %v288 = vlaneseq
    %v289 = vshrl.u32 %v288, 7
    %v290 = vsub.s32 0, %v289
    %v291 = vrot.slane %v286, %v290
    %293 = vmatprep.subr.mxu0 0.0
    %294 = vmatpush1.msra.mxu0 %v270
    %295 = vmatprep.subr.mxu0 0.0
    %296 = vmatpush1.msra.mxu0 %v271
    %297 = vmatprep.subr.mxu0 0.0
    %298 = vmatpush1.msra.mxu0 %v272
    %299 = vmatprep.subr.mxu0 0.0
    %300 = vmatpush1.msra.mxu0 %v273
    %301 = vmatprep.subr.mxu0 0.0
    %302 = vmatpush1.msra.mxu0 %v274
    %303 = vmatprep.subr.mxu0 0.0
    %304 = vmatpush1.msra.mxu0 %v275
    %305 = vmatprep.subr.mxu0 0.0
    %306 = vmatpush1.msra.mxu0 %v276
    %307 = vmatprep.subr.mxu0 0.0
    %308 = vmatpush1.msra.mxu0 %v277
    %309 = vmatprep.subr.mxu0 0.0
    %310 = vmatpush1.msra.mxu0 %v278
    %311 = vmatprep.subr.mxu0 0.0
    %312 = vmatpush1.msra.mxu0 %v279
    %313 = vmatprep.subr.mxu0 0.0
    %314 = vmatpush1.msra.mxu0 %v280
    %315 = vmatprep.subr.mxu0 0.0
    %316 = vmatpush1.msra.mxu0 %v281
    %317 = vmatprep.subr.mxu0 0.0
    %318 = vmatpush1.msra.mxu0 %v282
    %319 = vmatprep.subr.mxu0 0.0
    %320 = vmatpush1.msra.mxu0 %v283
    %321 = vmatprep.subr.mxu0 0.0
    %322 = vmatpush1.msra.mxu0 %v284
    %323 = vmatprep.subr.mxu0 0.0
    %324 = vmatpush1.msra.mxu0 %v285
    %325 = vmatprep.subr.mxu0 0.0
    %326 = vmatpush1.msra.mxu0 0.0
    %327 = vmatprep.subr.mxu0 0.0
    %328 = vmatpush1.msra.mxu0 0.0
    %329 = vmatprep.subr.mxu0 0.0
    %330 = vmatpush1.msra.mxu0 0.0
    %331 = vmatprep.subr.mxu0 0.0
    %332 = vmatpush1.msra.mxu0 0.0
    %333 = vmatprep.subr.mxu0 0.0
    %334 = vmatpush1.msra.mxu0 0.0
    %335 = vmatprep.subr.mxu0 0.0
    %336 = vmatpush1.msra.mxu0 0.0
    %337 = vmatprep.subr.mxu0 0.0
    %338 = vmatpush1.msra.mxu0 0.0
    %339 = vmatprep.subr.mxu0 0.0
    %340 = vmatpush1.msra.mxu0 0.0
    %341 = vmatprep.subr.mxu0 0.0
    %342 = vmatpush1.msra.mxu0 0.0
    %343 = vmatprep.subr.mxu0 0.0
    %344 = vmatpush1.msra.mxu0 0.0
    %345 = vmatprep.subr.mxu0 0.0
    %346 = vmatpush1.msra.mxu0 0.0
    %347 = vmatprep.subr.mxu0 0.0
    %348 = vmatpush1.msra.mxu0 0.0
    %349 = vmatprep.subr.mxu0 0.0
    %350 = vmatpush1.msra.mxu0 0.0
    %351 = vmatprep.subr.mxu0 0.0
    %352 = vmatpush1.msra.mxu0 0.0
    %353 = vmatprep.subr.mxu0 0.0
    %354 = vmatpush1.msra.mxu0 0.0
    %355 = vmatprep.subr.mxu0 0.0
    %356 = vmatpush1.msra.mxu0 0.0
    %357 = vmatprep.mubr.f32.mxu0 0.0
    %358 = vmatmul.mubr.f32.gmra.mrb[0].mxu0 %v269
    %v359 = vpop.f32.mrb[0].mxu0
    %v360 = vadd.f32 %v291, %v359
    %v361 = vpop.f32.mrb[0].mxu0
    %362 = vdwg.mxu0
    %363 = vst [vmem:[%s8] sm:$0xff] %v360
    // Predicated region
    $region42: #{similarity_forward.1} parent=1 // pred_check
      _
    $region43: #{similarity_forward.1} parent=1 // pred_check_branch
      %365 = sbr.rel (0) target = $region45
    $region44: #{similarity_forward.1} parent=1 // pred_region
      _
    $region45: #{similarity_forward.1} parent=1 // pred_fallthru
      _
    // Predicated region
    $region46: #{similarity_forward.1} parent=1 // pred_check
      _
    $region47: #{similarity_forward.1} parent=1 // pred_check_branch
      %367 = sbr.rel (0) target = $region49
    $region48: #{similarity_forward.1} parent=1 // pred_region
      _
    $region49: #{similarity_forward.1} parent=1 // pred_fallthru
      _
    %368 = vsyncpa [#allocation3], 1
    %369 = vsyncpa [#allocation5], 1

</llo_original>
